<compile_context>
chip_gen: v5e
topology: v5e:2x2
jax: 0.10.0
libtpu: 0.0.40
codegen_flags: <defaults>
</compile_context>

<pallas_src>
import functools

import jax
import jax.numpy as jnp
import numpy as np
from jax.experimental import pallas as pl
from jax.experimental.pallas import tpu as pltpu


def _upsample_kernel(x_ref, e_ref, o_ref):
    # x_ref: (TILE_M, W)           rows are flattened (n, c, h)
    # e_ref: (W, scale*W_out)      0/1 combined W-expansion + row-repeat matrix
    # o_ref: (TILE_M, scale*W_out) row-major-compatible output slab
    o_ref[...] = jnp.dot(
        x_ref[...], e_ref[...], preferred_element_type=jnp.float32
    ).astype(o_ref.dtype)


def _choose_tile_m(M: int, L: int, itemsize: int) -> int:
    """Rows per grid step: ~2 MiB output block, multiple of 8, divides M,
    and keeps >=2 grid steps when possible (megacore sharding)."""
    if M % 8 != 0:
        return M  # full-extent sublane block is always legal
    target_out_bytes = 2 * 1024 * 1024
    t = (target_out_bytes // max(1, L * itemsize)) // 8 * 8
    t = max(8, min(t, M))
    if t >= M and M >= 16:
        t = max(8, (M // 2) // 8 * 8)
    while M % t != 0:  # terminates at 8, which divides M (M % 8 == 0)
        t -= 8
    return t


def _expansion_matrix(W: int, scale: int) -> np.ndarray:
    # ewt[w, c] = 1 iff c // scale == w  (floor indexing == PyTorch 'nearest')
    W_out = W * scale
    ewt = np.arange(W_out)[None, :] // scale == np.arange(W)[:, None]
    # Tile `scale` times along the lane axis -> also performs the H-row repeat
    # thanks to the row-major output layout.
    return np.concatenate([ewt] * scale, axis=1)  # (W, scale*W_out), bool


@functools.partial(jax.jit, static_argnames=("scale",))
def upsample_fp32(x: jnp.ndarray, scale: int) -> jnp.ndarray:
    """Nearest-neighbor upsample of an NCHW tensor by integer `scale`."""
    N, C, H, W = x.shape
    s = int(scale)
    H_out, W_out = H * s, W * s
    M = N * C * H          # rows folded into the MXU M dimension
    L = s * W_out          # output lane width per input row (= scale^2 * W)

    e = jnp.asarray(_expansion_matrix(W, s), dtype=x.dtype)   # exact 0/1
    x2 = x.reshape(M, W)                                      # free reshape

    tile_m = _choose_tile_m(M, L, jnp.dtype(x.dtype).itemsize)

    out2 = pl.pallas_call(
        _upsample_kernel,
        out_shape=jax.ShapeDtypeStruct((M, L), x.dtype),
        grid=(M // tile_m,),
        in_specs=[
            pl.BlockSpec((tile_m, W), lambda i: (i, 0)),
            pl.BlockSpec((W, L), lambda i: (0, 0)),   # resident, DMA'd once
        ],
        out_specs=pl.BlockSpec((tile_m, L), lambda i: (i, 0)),
        compiler_params=pltpu.CompilerParams(
            dimension_semantics=("parallel",)
        ),
    )(x2, e)

    return out2.reshape(N, C, H_out, W_out)                   # free reshape


if __name__ == "__main__":
    k1, k2 = jax.random.split(jax.random.PRNGKey(0))
    N, C, H, W = 2, 4, 16, 16
    scale = 2

    x = jax.random.normal(k1, (N, C, H, W), dtype=jnp.float32)
    out = jax.block_until_ready(upsample_fp32(x, scale=scale))
    ref = jnp.repeat(jnp.repeat(x, scale, axis=2), scale, axis=3)
    assert out.shape == (N, C, H * scale, W * scale), out.shape
    assert out.dtype == x.dtype, out.dtype
    assert bool(jnp.allclose(out, ref)), "fp32 mismatch vs nearest-neighbor reference"

    # bf16 path of UpsampleFP32 (upsampled "in fp32", cast back): bit-exact.
    x_bf16 = x.astype(jnp.bfloat16)
    out_bf16 = jax.block_until_ready(upsample_fp32(x_bf16, scale=scale))
    ref_bf16 = jnp.repeat(jnp.repeat(x_bf16, scale, axis=2), scale, axis=3)
    assert out_bf16.dtype == jnp.bfloat16
    assert bool(jnp.all(out_bf16 == ref_bf16)), "bf16 mismatch"

    # A second shape / scale to exercise a multi-step grid and scale=4.
    x_b = jax.random.normal(k2, (1, 3, 8, 32), dtype=jnp.float32)
    out_b = jax.block_until_ready(upsample_fp32(x_b, scale=4))
    ref_b = jnp.repeat(jnp.repeat(x_b, 4, axis=2), 4, axis=3)
    assert bool(jnp.allclose(out_b, ref_b)), "scale=4 mismatch"

    print("KERNEL_OK")
</pallas_src>

<mosaic_0001>
module attributes {stable_mosaic.version = 11 : i64} {
  func.func @_upsample_kernel(%arg0: i32, %arg1: memref<64x16xf32, #tpu.memory_space<vmem>>, %arg2: memref<16x64xf32, #tpu.memory_space<vmem>>, %arg3: memref<64x64xf32, #tpu.memory_space<vmem>>) attributes {dimension_semantics = [#tpu.dimension_semantics<parallel>], iteration_bounds = array<i64: 2>, scalar_prefetch = 0 : i64, scratch_operands = 0 : i64, tpu.core_type = #tpu.core_type<tc>, window_params = [{transform_indices = @transform_0, window_bounds = array<i64: 64, 16>}, {pipeline_mode = #tpu.pipeline_mode<synchronous>, transform_indices = @transform_1, window_bounds = array<i64: 16, 64>}, {transform_indices = @transform_2, window_bounds = array<i64: 64, 64>}]} {
    %c0 = arith.constant 0 : index
    %c0_0 = arith.constant 0 : index
    %0 = vector.load %arg1[%c0, %c0_0] : memref<64x16xf32, #tpu.memory_space<vmem>>, vector<64x16xf32>
    %c0_1 = arith.constant 0 : index
    %c0_2 = arith.constant 0 : index
    %1 = vector.load %arg2[%c0_1, %c0_2] : memref<16x64xf32, #tpu.memory_space<vmem>>, vector<16x64xf32>
    %cst = arith.constant dense<0.000000e+00> : vector<64x64xf32>
    %2 = tpu.matmul %0, %1, %cst {dimension_numbers = #tpu.dot_dimension_numbers<[1], [0], [0], [1], [0, 0, 1, 1], [], []>} : vector<64x16xf32>, vector<16x64xf32>, vector<64x64xf32> -> vector<64x64xf32>
    %c0_3 = arith.constant 0 : index
    %c0_4 = arith.constant 0 : index
    %3 = vector.load %arg3[%c0_3, %c0_4] : memref<64x64xf32, #tpu.memory_space<vmem>>, vector<64x64xf32>
    tpu.vector_store %arg3[%c0_3, %c0_4], %2 {strides = array<i32>} : memref<64x64xf32, #tpu.memory_space<vmem>>, vector<64x64xf32>,
    return
  }
  func.func @transform_0(%arg0: i32) -> (i32, i32) {
    %c0_i32 = arith.constant 0 : i32
    %c0_i32_0 = arith.constant 0 : i32
    return %arg0, %c0_i32 : i32, i32
  }
  func.func @transform_1(%arg0: i32) -> (i32, i32) {
    %c0_i32 = arith.constant 0 : i32
    %c0_i32_0 = arith.constant 0 : i32
    %c0_i32_1 = arith.constant 0 : i32
    return %c0_i32, %c0_i32_0 : i32, i32
  }
  func.func @transform_2(%arg0: i32) -> (i32, i32) {
    %c0_i32 = arith.constant 0 : i32
    %c0_i32_0 = arith.constant 0 : i32
    return %arg0, %c0_i32 : i32, i32
  }
}

</mosaic_0001>

<llo_original>
// kernel: upsample_fp32.1
$region0: #{upsample_fp32.1}
  #allocation0 [shape = 'u32[]', space=smem, size = 0x4, offset = 0x4, fixed_abs, tag = 'smem constant byte address 0x4 - core index']
  #allocation1 [shape = 'u32[72,128]{1,0:T(1,128)}', space=vmem, size = 0x9000, scoped, tag = 'internal scratch']
  %s0 = inlined_call_operand.hbm [shape: f32[128,16], index: 0, kind: input, shape index: {}]
  %s1 = inlined_call_operand.hbm [shape: f32[16,64], index: 1, kind: input, shape index: {}]
  %s2 = inlined_call_operand.vmem [shape: f32[128,64], index: 2, kind: output, shape index: {}]
  %s3 = sld [smem:[#allocation0]]
  $region49: #{upsample_fp32.1} parent=0
    _
  %s5 = ssub.s32 1, %s3
  %s6 = scalar_select 0, %s5, %s3
  $region1: #{upsample_fp32.1} parent=0
    #allocation2 [shape = 'u8[65536]{0}', space=vmem, size = 0x10000, scoped, tag = 'input window, operand 0']
    #allocation3 [shape = 's32[2]{0}', space=sflag, size = 0x8, scoped, tag = 'scoped memory for upsample_fp32.1']
    #allocation4 [shape = 'u8[8192]{0}', space=vmem, size = 0x2000, scoped, tag = 'input window, operand 1, single buffered']
    #allocation5 [shape = 's32[1]{0}', space=sflag, size = 0x4, scoped, tag = 'scoped memory for upsample_fp32.1']
    %7 = vsyncpa [#allocation3], 0
    %s8 = scalar_lea.sflag [#allocation3], 1
    %9 = vsyncpa %s8, 0
    %10 = vsyncpa [#allocation5], 0
    loop: start=0, step=1, limit=4
    $region2: #{upsample_fp32.1} parent=1 // loop_pre_header
      _
    $region3: #{upsample_fp32.1} parent=1 // loop_header
      %s12 = sphi 0, %s16
      %p13 = scmp.ge.s32.totalorder %s12, 4
      %s22 = sphi 0, %s24
      %s25 = sphi 0, %s22
      %s26 = sphi 0, %s25
      %s42 = sphi 0, %s26
      %s46 = sphi 0, %s46
      %s48 = sphi 0, %s46
      %s49 = sphi 0, %s48
      %s63 = sphi 0, %s49
      %s69 = sphi 0, %s71
      %s72 = sphi 0, %s69
      %s73 = sphi 0, %s72
      %s89 = sphi 0, %s73
    $region4: #{upsample_fp32.1} parent=1 // loop_header_branch
      %15 = sbr.rel (%p13) target = $region8
    $region5: #{upsample_fp32.1} parent=1 // loop_body
      %s17 = ssub.s32 %s12, 1
      %s18 = ssub.s32 %s12, 2
      %s19 = sadd.s32 %s12, 1
      %s20 = ssub.s32 %s12, %s19
      %p21 = scmp.eq.s32.totalorder %s20, 0
      %s23 = sadd.s32 %s22, 1
      %s24 = scalar_select %p21, %s22, %s23
      %p27 = pneg %p21
      %p28 = scmp.eq.s32.totalorder %s12, 1
      %p29 = por %p27, %p28
      %p30 = scmp.ne.s32.totalorder %s22, %s25
      %p31 = scmp.eq.s32.totalorder %s12, 0
      %p32 = por %p30, %p31
      %p33 = scmp.ne.s32.totalorder %s22, %s25
      %p34 = scmp.eq.s32.totalorder %s17, 1
      %p35 = por %p33, %p34
      %p36 = scmp.ne.s32.totalorder %s25, %s26
      %p37 = scmp.eq.s32.totalorder %s17, 0
      %p38 = por %p36, %p37
      %p39 = scmp.ne.s32.totalorder %s25, %s26
      %p40 = scmp.eq.s32.totalorder %s18, 1
      %p41 = por %p39, %p40
      %p43 = scmp.ne.s32.totalorder %s26, %s42
      %p44 = scmp.eq.s32.totalorder %s18, 0
      %p45 = por %p43, %p44
      %s47 = sadd.s32 %s46, 1
      %p50 = scmp.eq.s32.totalorder %s12, 1
      %p51 = scmp.ne.s32.totalorder %s46, %s48
      %p52 = scmp.eq.s32.totalorder %s12, 0
      %p53 = por %p51, %p52
      %p54 = scmp.ne.s32.totalorder %s46, %s48
      %p55 = scmp.eq.s32.totalorder %s17, 1
      %p56 = por %p54, %p55
      %p57 = scmp.ne.s32.totalorder %s48, %s49
      %p58 = scmp.eq.s32.totalorder %s17, 0
      %p59 = por %p57, %p58
      %p60 = scmp.ne.s32.totalorder %s48, %s49
      %p61 = scmp.eq.s32.totalorder %s18, 1
      %p62 = por %p60, %p61
      %p64 = scmp.ne.s32.totalorder %s49, %s63
      %p65 = scmp.eq.s32.totalorder %s18, 0
      %p66 = por %p64, %p65
      %s67 = ssub.s32 %s12, %s19
      %p68 = scmp.eq.s32.totalorder %s67, 0
      %s70 = sadd.s32 %s69, 1
      %s71 = scalar_select %p68, %s69, %s70
      %p74 = pneg %p68
      %p75 = scmp.eq.s32.totalorder %s12, 1
      %p76 = por %p74, %p75
      %p77 = scmp.ne.s32.totalorder %s69, %s72
      %p78 = scmp.eq.s32.totalorder %s12, 0
      %p79 = por %p77, %p78
      %p80 = scmp.ne.s32.totalorder %s69, %s72
      %p81 = scmp.eq.s32.totalorder %s17, 1
      %p82 = por %p80, %p81
      %p83 = scmp.ne.s32.totalorder %s72, %s73
      %p84 = scmp.eq.s32.totalorder %s17, 0
      %p85 = por %p83, %p84
      %p86 = scmp.ne.s32.totalorder %s72, %s73
      %p87 = scmp.eq.s32.totalorder %s18, 1
      %p88 = por %p86, %p87
      %p90 = scmp.ne.s32.totalorder %s73, %s89
      %p91 = scmp.eq.s32.totalorder %s18, 0
      %p92 = por %p90, %p91
      %p93 = scmp.le.s32.totalorder 1, %s12
      %p94 = scmp.lt.s32.totalorder %s12, 3
      %p95 = pnand %p93, %p94
      %p96 = pneg %p95
      // Predicated region
      $region9: #{upsample_fp32.1} parent=5 // pred_check
        _
      $region10: #{upsample_fp32.1} parent=5 // pred_check_branch
        %98 = sbr.rel (%p95) target = $region12
      $region11: #{upsample_fp32.1} parent=5 // pred_region
        %s99 = ssub.s32 %s12, 1
        // Predicated region
        $region13: #{upsample_fp32.1} parent=11 // pred_check
          %p100 = pneg %p59
        $region14: #{upsample_fp32.1} parent=11 // pred_check_branch
          %102 = sbr.rel (%p100) target = $region16
        $region15: #{upsample_fp32.1} parent=11 // pred_region
          %104 = vsyncadd [#allocation5], 0
          %s105 = sshll.u32 %s1, 4
          %s106 = int_to_ptr.hbm [resolvable:$true] %s105
          %s107 = sshll.u32 [#allocation4], 4
          %s108 = int_to_ptr.vmem [resolvable:$true] %s107
          %113 = dma.hbm_to_vmem [thread:$0]  %s106, 256, %s108, [#allocation5], 128, 128, 8
        $region16: #{upsample_fp32.1} parent=11 // pred_fallthru
          _
      $region12: #{upsample_fp32.1} parent=5 // pred_fallthru
        _
      %p114 = scmp.lt.s32.totalorder %s12, 2
      // Predicated region
      $region17: #{upsample_fp32.1} parent=5 // pred_check
        %p115 = pneg %p114
      $region18: #{upsample_fp32.1} parent=5 // pred_check_branch
        %117 = sbr.rel (%p115) target = $region20
      $region19: #{upsample_fp32.1} parent=5 // pred_region
        // Predicated region
        $region21: #{upsample_fp32.1} parent=19 // pred_check
          %p118 = pneg %p32
        $region22: #{upsample_fp32.1} parent=19 // pred_check_branch
          %120 = sbr.rel (%p118) target = $region24
        $region23: #{upsample_fp32.1} parent=19 // pred_region
          %s121 = sand.u32 %s22, 1
          %s122 = scalar_lea.sflag [#allocation3], %s121
          %s123 = sand.u32 %s22, 1
          %s124 = smul.addr %s123, 64
          %s125 = scalar_lea.vmem [#allocation2], %s124
          %s126 = smul.u32 8, %s12
          %128 = vsyncadd %s122, 0
          %s129 = smul.addr %s126, 8
          %s130 = scalar_lea.hbm %s0, %s129
          %s131 = sshll.u32 %s130, 4
          %s132 = int_to_ptr.hbm [resolvable:$true] %s131
          %s133 = sshll.u32 %s125, 4
          %s134 = int_to_ptr.vmem [resolvable:$true] %s133
          %139 = dma.hbm_to_vmem [thread:$0]  %s132, 1024, %s134, %s122, 128, 128, 8
        $region24: #{upsample_fp32.1} parent=19 // pred_fallthru
          _
      $region20: #{upsample_fp32.1} parent=5 // pred_fallthru
        _
      %p140 = scmp.le.s32.totalorder 1, %s12
      %p141 = scmp.lt.s32.totalorder %s12, 3
      %p142 = pnand %p140, %p141
      %p143 = pneg %p142
      // Predicated region
      $region25: #{upsample_fp32.1} parent=5 // pred_check
        _
      $region26: #{upsample_fp32.1} parent=5 // pred_check_branch
        %145 = sbr.rel (%p142) target = $region28
      $region27: #{upsample_fp32.1} parent=5 // pred_region
        %s146 = ssub.s32 %s12, 1
        %s147 = sand.u32 %s25, 1
        %s148 = scalar_lea.sflag [#allocation3], %s147
        %s149 = sand.u32 %s25, 1
        %s150 = smul.addr %s149, 64
        %s151 = scalar_lea.vmem [#allocation2], %s150
        // Predicated region
        $region29: #{upsample_fp32.1} parent=27 // pred_check
          %p152 = pneg %p38
        $region30: #{upsample_fp32.1} parent=27 // pred_check_branch
          %154 = sbr.rel (%p152) target = $region32
        $region31: #{upsample_fp32.1} parent=27 // pred_region
          %156 = dma.done %s148, 1024
        $region32: #{upsample_fp32.1} parent=27 // pred_fallthru
          _
        // Predicated region
        $region33: #{upsample_fp32.1} parent=27 // pred_check
          %p157 = pneg %p59
        $region34: #{upsample_fp32.1} parent=27 // pred_check_branch
          %159 = sbr.rel (%p157) target = $region36
        $region35: #{upsample_fp32.1} parent=27 // pred_region
          %161 = dma.done [#allocation5], 256
        $region36: #{upsample_fp32.1} parent=27 // pred_fallthru
          _
        %s162 = sand.u32 %s25, 1
        %s163 = scalar_lea.sflag [#allocation3], %s162
        %s164 = sand.u32 %s25, 1
        %s165 = smul.addr %s164, 64
        %s166 = scalar_lea.vmem [#allocation2], %s165
        %p167 = pneg %p38
        %p168 = pneg %p35
        %p169 = pneg %p59
        %p170 = pneg %p56
        %p171 = pneg %p85
        %p172 = pneg %p82
        %s173 = smul.u32 8, %s17
        %p174 = scmp.lt.s32.totalorder %s173, 15
        %s175 = scalar_select %p174, %s173, 15
        %s176 = smul.addr %s175, 8
        %s177 = scalar_lea.vmem %s2, %s176
        %s178 = smul.u32 8, %s17
        %s179 = smul.u32 8, %s17
        %p180 = scmp.lt.s32.totalorder %s179, 15
        %s181 = scalar_select %p180, %s179, 15
        %s182 = smul.addr %s181, 8
        %s183 = scalar_lea.vmem %s2, %s182
        %s184 = smul.u32 8, %s17
        %v185 = vld [vmem:[%s151] sm:$0xff]
        %v186 = vld [vmem:[%s151 + $0x8] sm:$0xff]
        %v187 = vld [vmem:[%s151 + $0x10] sm:$0xff]
        %v188 = vld [vmem:[%s151 + $0x18] sm:$0xff]
        %v189 = vld [vmem:[%s151 + $0x20] sm:$0xff]
        %v190 = vld [vmem:[%s151 + $0x28] sm:$0xff]
        %v191 = vld [vmem:[%s151 + $0x30] sm:$0xff]
        %v192 = vld [vmem:[%s151 + $0x38] sm:$0xff]
        %v193 = vld [vmem:[#allocation4] sm:$0xff]
        %v194 = vld [vmem:[#allocation4 + $0x8] sm:$0xff]
        %vm195 = vcmask 130048
        %v197 = vsel %vm195, %v185, 0
        %v200 = vsel %vm195, %v186, 0
        %v203 = vsel %vm195, %v187, 0
        %v206 = vsel %vm195, %v188, 0
        %v209 = vsel %vm195, %v189, 0
        %v212 = vsel %vm195, %v190, 0
        %v215 = vsel %vm195, %v191, 0
        %v218 = vsel %vm195, %v192, 0
        %220 = vmatpush.msra.mxu0 0.0
        %221 = vmatpush.msra.mxu0 0.0
        %222 = vmatpush.msra.mxu0 0.0
        %223 = vmatpush.msra.mxu0 0.0
        %224 = vmatpush.msra.mxu0 0.0
        %225 = vmatpush.msra.mxu0 0.0
        %226 = vmatpush.msra.mxu0 0.0
        %227 = vmatpush.msra.mxu0 0.0
        %228 = vmatpush.msra.mxu0 0.0
        %229 = vmatpush.msra.mxu0 0.0
        %230 = vmatpush.msra.mxu0 0.0
        %231 = vmatpush.msra.mxu0 0.0
        %232 = vmatpush.msra.mxu0 0.0
        %233 = vmatpush.msra.mxu0 0.0
        %234 = vmatpush.msra.mxu0 %v194
        %235 = vmatpush.msra.mxu0 %v193
        %236 = vmatmul.f32.gmra.mxu0 %v197
        %v237 = vpop.f32.mrf.mxu0
        %v238 = vadd.f32 0.0, %v237
        %239 = vmatmul.f32.gmra.mxu0 %v200
        %v240 = vpop.f32.mrf.mxu0
        %v241 = vadd.f32 0.0, %v240
        %242 = vmatmul.f32.gmra.mxu0 %v203
        %v243 = vpop.f32.mrf.mxu0
        %v244 = vadd.f32 0.0, %v243
        %245 = vmatmul.f32.gmra.mxu0 %v206
        %v246 = vpop.f32.mrf.mxu0
        %v247 = vadd.f32 0.0, %v246
        %248 = vmatmul.f32.gmra.mxu0 %v209
        %v249 = vpop.f32.mrf.mxu0
        %v250 = vadd.f32 0.0, %v249
        %251 = vmatmul.f32.gmra.mxu0 %v212
        %v252 = vpop.f32.mrf.mxu0
        %v253 = vadd.f32 0.0, %v252
        %254 = vmatmul.f32.gmra.mxu0 %v215
        %v255 = vpop.f32.mrf.mxu0
        %v256 = vadd.f32 0.0, %v255
        %257 = vmatmul.f32.gmra.mxu0 %v218
        %v258 = vpop.f32.mrf.mxu0
        %v259 = vadd.f32 0.0, %v258
        %260 = vdwg.mxu0
        %vm261 = vcmask 523264
        %262 = vst.msk [vmem:[%s183] sm:$0xff] %vm261, %v238
        %263 = vst.msk [vmem:[%s183 + $0x8] sm:$0xff] %vm261, %v241
        %264 = vst.msk [vmem:[%s183 + $0x10] sm:$0xff] %vm261, %v244
        %265 = vst.msk [vmem:[%s183 + $0x18] sm:$0xff] %vm261, %v247
        %266 = vst.msk [vmem:[%s183 + $0x20] sm:$0xff] %vm261, %v250
        %267 = vst.msk [vmem:[%s183 + $0x28] sm:$0xff] %vm261, %v253
        %268 = vst.msk [vmem:[%s183 + $0x30] sm:$0xff] %vm261, %v256
        %269 = vst.msk [vmem:[%s183 + $0x38] sm:$0xff] %vm261, %v259
        %s270 = smul.u32 8, %s17
        %p271 = scmp.lt.s32.totalorder %s270, 15
        %s272 = scalar_select %p271, %s270, 15
        %s273 = smul.addr %s272, 8
        %s274 = scalar_lea.vmem %s2, %s273
        // Predicated region
        $region37: #{upsample_fp32.1} parent=27 // pred_check
          %p275 = pneg %p82
        $region38: #{upsample_fp32.1} parent=27 // pred_check_branch
          %277 = sbr.rel (%p275) target = $region40
        $region39: #{upsample_fp32.1} parent=27 // pred_region
          %s278 = smul.u32 8, %s17
        $region40: #{upsample_fp32.1} parent=27 // pred_fallthru
          _
      $region28: #{upsample_fp32.1} parent=5 // pred_fallthru
        _
      %p279 = scmp.le.s32.totalorder 2, %s12
      // Predicated region
      $region41: #{upsample_fp32.1} parent=5 // pred_check
        %p280 = pneg %p279
      $region42: #{upsample_fp32.1} parent=5 // pred_check_branch
        %282 = sbr.rel (%p280) target = $region44
      $region43: #{upsample_fp32.1} parent=5 // pred_region
        %s283 = ssub.s32 %s12, 2
        // Predicated region
        $region45: #{upsample_fp32.1} parent=43 // pred_check
          %p284 = pneg %p88
        $region46: #{upsample_fp32.1} parent=43 // pred_check_branch
          %286 = sbr.rel (%p284) target = $region48
        $region47: #{upsample_fp32.1} parent=43 // pred_region
          %s287 = smul.u32 8, %s18
          %p288 = scmp.lt.s32.totalorder %s287, 15
          %s289 = scalar_select %p288, %s287, 15
          %s290 = smul.addr %s289, 8
          %s291 = scalar_lea.vmem %s2, %s290
        $region48: #{upsample_fp32.1} parent=43 // pred_fallthru
          _
      $region44: #{upsample_fp32.1} parent=5 // pred_fallthru
        _
    $region6: #{upsample_fp32.1} parent=1 // loop_footer
      %s16 = sadd.s32 1, %s12
    $region7: #{upsample_fp32.1} parent=1 // loop_footer_branch
      %11 = sbr.rel target = $region3
    $region8: #{upsample_fp32.1} parent=1 // loop_exit
      _
    %292 = vsyncpa [#allocation3], 1
    %s293 = scalar_lea.sflag [#allocation3], 1
    %294 = vsyncpa %s293, 1
    %295 = vsyncpa [#allocation5], 1

</llo_original>
